<compile_context>
chip_gen: v5e
topology: v5e:2x2
jax: 0.10.0
libtpu: 0.0.40
codegen_flags: <defaults>
</compile_context>

<pallas_src>
import functools

import jax
import jax.numpy as jnp
from jax import lax
from jax.experimental import pallas as pl
from jax.experimental.pallas import tpu as pltpu


def _vmem_capacity_bytes():
    """Generation-aware VMEM capacity (falls back to 128 MiB)."""
    try:
        info = pltpu.get_tpu_info()
        cap = getattr(info, "vmem_capacity_bytes", None)
        if cap:
            return int(cap)
    except Exception:
        pass
    return 128 << 20


# --------------------------------------------------------------------------
# Path 1: small-batch row gather via manual DMA (table never leaves HBM).
# --------------------------------------------------------------------------

def _gather_kernel_body(n_rows, ids_ref, table_hbm, out_ref, row_buf, sems):
    # ids_ref:   (B,) int32, SMEM (scalar-prefetched)
    # table_hbm: (n_classes, embed_dim), HBM (pl.ANY) -- gathered via DMA
    # out_ref:   (B, embed_dim), VMEM output block
    # row_buf:   (B, embed_dim), VMEM DMA landing buffer
    # sems:      (B,) DMA semaphores
    # Issue all row DMAs back-to-back ...
    for i in range(n_rows):
        row = ids_ref[i]
        pltpu.make_async_copy(
            table_hbm.at[pl.ds(row, 1)], row_buf.at[pl.ds(i, 1)], sems.at[i]
        ).start()
    # ... then wait once per row (src slice only fixes the transfer size).
    for i in range(n_rows):
        pltpu.make_async_copy(
            table_hbm.at[pl.ds(0, 1)], row_buf.at[pl.ds(i, 1)], sems.at[i]
        ).wait()
    out_ref[...] = row_buf[...]


def _gather_rows(ids, table):
    B = ids.shape[0]
    n_classes, embed_dim = table.shape
    itemsize = jnp.dtype(table.dtype).itemsize

    kernel = functools.partial(_gather_kernel_body, B)
    cost = pl.CostEstimate(
        flops=0,
        transcendentals=0,
        bytes_accessed=2 * B * embed_dim * itemsize + B * 4,
    )
    return pl.pallas_call(
        kernel,
        out_shape=jax.ShapeDtypeStruct((B, embed_dim), table.dtype),
        grid_spec=pltpu.PrefetchScalarGridSpec(
            num_scalar_prefetch=1,
            grid=(1,),
            in_specs=[pl.BlockSpec(memory_space=pl.ANY)],
            out_specs=pl.BlockSpec((B, embed_dim), lambda i, ids_pref: (0, 0)),
            scratch_shapes=[
                pltpu.VMEM((B, embed_dim), table.dtype),
                pltpu.SemaphoreType.DMA((B,)),
            ],
        ),
        compiler_params=pltpu.CompilerParams(
            dimension_semantics=("arbitrary",)),
        cost_estimate=cost,
    )(ids, table)


# --------------------------------------------------------------------------
# Path 2: full-table streaming, gather as one-hot @ table MXU matmul.
# --------------------------------------------------------------------------

def _full_table_kernel(ids_ref, table_ref, out_ref):
    # ids_ref:   (bb, 1)          int32, VMEM
    # table_ref: (n_classes, tn)  table column block, VMEM
    # out_ref:   (bb, tn)         output block, VMEM
    ids = ids_ref[...]
    bb = ids_ref.shape[0]
    n_classes = table_ref.shape[0]
    class_iota = lax.broadcasted_iota(jnp.int32, (bb, n_classes), 1)
    onehot = (class_iota == ids).astype(table_ref.dtype)
    # Exact gather: one-hot rows have a single 1.0 entry.
    out_ref[...] = jnp.dot(
        onehot, table_ref[...], preferred_element_type=jnp.float32
    ).astype(out_ref.dtype)


def _pick_col_block(n_classes, embed_dim, itemsize, cap_bytes):
    """Largest lane-aligned column block that fits the cap, forcing >=2 blocks
    when embed_dim >= 256 (DMA/compute overlap + megacore split)."""
    if embed_dim % 128 != 0:
        # Lane dim cannot be tiled to 128 multiples -> take the full width.
        return embed_dim
    cands = [w for w in range(128, embed_dim + 1, 128) if embed_dim % w == 0]
    max_w = embed_dim if embed_dim < 256 else embed_dim // 2
    ok = [w for w in cands
          if w <= max_w and n_classes * w * itemsize <= cap_bytes]
    return max(ok) if ok else 128


def _onehot_matmul(ids, table):
    B = ids.shape[0]
    n_classes, embed_dim = table.shape
    itemsize = jnp.dtype(table.dtype).itemsize
    vmem_cap = _vmem_capacity_bytes()

    tn = _pick_col_block(n_classes, embed_dim, itemsize,
                         cap_bytes=vmem_cap // 16)
    bb = min(B, 256)                       # bound the (bb, n_classes) one-hot
    grid = (pl.cdiv(B, bb), embed_dim // tn)
    ids2 = ids.reshape(-1, 1)

    # Double-buffered table / out / ids blocks + f32 one-hot + i32 iota.
    needed = (2 * (n_classes * tn + bb * tn) * itemsize
              + 2 * bb * 4
              + 2 * bb * n_classes * 4)
    vmem_limit = int(min(vmem_cap * 3 // 4,
                         max(32 << 20, needed + (4 << 20))))

    cost = pl.CostEstimate(
        flops=2 * B * n_classes * embed_dim,
        transcendentals=0,
        bytes_accessed=(n_classes * embed_dim + B * embed_dim) * itemsize + B * 4,
    )
    return pl.pallas_call(
        _full_table_kernel,
        out_shape=jax.ShapeDtypeStruct((B, embed_dim), table.dtype),
        grid=grid,
        in_specs=[
            # ids: depends only on the batch block index.
            pl.BlockSpec((bb, 1), lambda i, j: (i, 0)),
            # table: full class count, one lane-aligned column block per step.
            pl.BlockSpec((n_classes, tn), lambda i, j: (0, j)),
        ],
        out_specs=pl.BlockSpec((bb, tn), lambda i, j: (i, j)),
        compiler_params=pltpu.CompilerParams(
            dimension_semantics=("parallel", "parallel"),
            vmem_limit_bytes=vmem_limit),
        cost_estimate=cost,
    )(ids2, table)


# --------------------------------------------------------------------------
# Wrapper matching ClassEmbedder.forward.
# --------------------------------------------------------------------------

def class_embedder_forward(batch, embedding_table, key="class",
                           force_full_table=False):
    """Pallas implementation of ClassEmbedder.forward.

    Args:
      batch: dict with `key` -> int array of shape (B,) (class indices).
      embedding_table: (n_classes, embed_dim) embedding weights.
      key: dict key to read class ids from.
      force_full_table: skip the small-batch gather path (testing / large B).

    Returns:
      (B, 1, embed_dim) embeddings (same dtype as the table), matching the
      PyTorch module.
    """
    ids = jnp.asarray(batch[key], dtype=jnp.int32).reshape(-1)
    B = ids.shape[0]
    n_classes, embed_dim = embedding_table.shape
    itemsize = jnp.dtype(embedding_table.dtype).itemsize

    # torch.nn.Embedding raises on out-of-range ids; we clamp instead so a bad
    # id can never become an out-of-bounds DMA.
    # TODO(synk): no in-kernel equivalent of torch's index-out-of-range error.
    ids = jnp.clip(ids, 0, n_classes - 1)

    gather_bytes = B * embed_dim * itemsize
    table_bytes = n_classes * embed_dim * itemsize
    use_gather = (not force_full_table
                  and B <= 128
                  and 4 * gather_bytes <= table_bytes)

    if use_gather:
        out = _gather_rows(ids, embedding_table)
    else:
        out = _onehot_matmul(ids, embedding_table)

    # Reproduce the `[:, None]` from the PyTorch forward: (B, 1, embed_dim).
    return out[:, None, :]


def make_class_embedder_params(embed_dim, n_classes, key):
    # nn.Embedding default init: weight ~ N(0, 1), shape (n_classes, embed_dim).
    return jax.random.normal(key, (n_classes, embed_dim), dtype=jnp.float32)


if __name__ == "__main__":
    embed_dim = 32
    n_classes = 1000
    batch_size = 2

    root = jax.random.PRNGKey(0)
    k_table, k_ids = jax.random.split(root)

    embedding_table = make_class_embedder_params(embed_dim, n_classes, k_table)
    class_ids = jax.random.randint(
        k_ids, (batch_size,), 0, n_classes, dtype=jnp.int32)
    batch = {"class": class_ids}

    ref = embedding_table[class_ids][:, None, :]

    # Small-batch path: per-row manual-DMA gather.
    out_gather = jax.block_until_ready(
        class_embedder_forward(batch, embedding_table))
    assert out_gather.shape == (batch_size, 1, embed_dim), out_gather.shape
    assert out_gather.dtype == jnp.float32
    assert jnp.allclose(out_gather, ref, atol=1e-5, rtol=1e-5), \
        "gather path mismatch vs reference"

    # Full-table path (forced) to exercise the one-hot matmul kernel as well.
    out_full = jax.block_until_ready(
        class_embedder_forward(batch, embedding_table, force_full_table=True))
    assert out_full.shape == (batch_size, 1, embed_dim), out_full.shape
    assert jnp.allclose(out_full, ref, atol=1e-5, rtol=1e-5), \
        "full-table path mismatch vs reference"

    print("KERNEL_OK")
</pallas_src>

<mosaic_0001>
module attributes {stable_mosaic.version = 11 : i64} {
  func.func @_gather_kernel_body(%arg0: i32, %arg1: memref<2xi32, #tpu.memory_space<smem>>, %arg2: memref<1000x32xf32, #tpu.memory_space<any>>, %arg3: memref<2x32xf32, #tpu.memory_space<vmem>>, %arg4: memref<2x32xf32, #tpu.memory_space<vmem>>, %arg5: memref<2x!tpu.dma_semaphore, #tpu.memory_space<semaphore_mem>>) attributes {dimension_semantics = [#tpu.dimension_semantics<arbitrary>], iteration_bounds = array<i64: 1>, scalar_prefetch = 1 : i64, scratch_operands = 2 : i64, tpu.core_type = #tpu.core_type<tc>, window_params = [{}, {pipeline_mode = #tpu.pipeline_mode<synchronous>, transform_indices = @transform_1, window_bounds = array<i64: 2, 32>}]} {
    %c0 = arith.constant 0 : index
    %0 = memref.load %arg1[%c0] : memref<2xi32, #tpu.memory_space<smem>>
    %c0_i32 = arith.constant 0 : i32
    %c0_i32_0 = arith.constant 0 : i32
    %1 = tpu.memref_slice %arg2[%0, %c0_i32_0] : memref<1000x32xf32, #tpu.memory_space<any>> -> memref<1x32xf32, #tpu.memory_space<any>>
    %c0_i32_1 = arith.constant 0 : i32
    %c0_i32_2 = arith.constant 0 : i32
    %2 = tpu.memref_slice %arg4[%c0_i32_1, %c0_i32_2] : memref<2x32xf32, #tpu.memory_space<vmem>> -> memref<1x32xf32, #tpu.memory_space<vmem>>
    %3 = tpu.memref_slice %arg5[%c0_i32] : memref<2x!tpu.dma_semaphore, #tpu.memory_space<semaphore_mem>> -> memref<1x!tpu.dma_semaphore, #tpu.memory_space<semaphore_mem>>
    %4 = tpu.memref_squeeze %3 : memref<1x!tpu.dma_semaphore, #tpu.memory_space<semaphore_mem>> -> memref<!tpu.dma_semaphore, #tpu.memory_space<semaphore_mem>>
    tpu.enqueue_dma source(%1 : memref<1x32xf32, #tpu.memory_space<any>>) target(%2 : memref<1x32xf32, #tpu.memory_space<vmem>>) target_semaphore(%4 : memref<!tpu.dma_semaphore, #tpu.memory_space<semaphore_mem>>)
    %c1 = arith.constant 1 : index
    %5 = memref.load %arg1[%c1] : memref<2xi32, #tpu.memory_space<smem>>
    %c1_i32 = arith.constant 1 : i32
    %c0_i32_3 = arith.constant 0 : i32
    %6 = tpu.memref_slice %arg2[%5, %c0_i32_3] : memref<1000x32xf32, #tpu.memory_space<any>> -> memref<1x32xf32, #tpu.memory_space<any>>
    %c1_i32_4 = arith.constant 1 : i32
    %c0_i32_5 = arith.constant 0 : i32
    %7 = tpu.memref_slice %arg4[%c1_i32_4, %c0_i32_5] : memref<2x32xf32, #tpu.memory_space<vmem>> -> memref<1x32xf32, #tpu.memory_space<vmem>>
    %8 = tpu.memref_slice %arg5[%c1_i32] : memref<2x!tpu.dma_semaphore, #tpu.memory_space<semaphore_mem>> -> memref<1x!tpu.dma_semaphore, #tpu.memory_space<semaphore_mem>>
    %9 = tpu.memref_squeeze %8 : memref<1x!tpu.dma_semaphore, #tpu.memory_space<semaphore_mem>> -> memref<!tpu.dma_semaphore, #tpu.memory_space<semaphore_mem>>
    tpu.enqueue_dma source(%6 : memref<1x32xf32, #tpu.memory_space<any>>) target(%7 : memref<1x32xf32, #tpu.memory_space<vmem>>) target_semaphore(%9 : memref<!tpu.dma_semaphore, #tpu.memory_space<semaphore_mem>>)
    %c0_i32_6 = arith.constant 0 : i32
    %c0_i32_7 = arith.constant 0 : i32
    %c0_i32_8 = arith.constant 0 : i32
    %10 = tpu.memref_slice %arg2[%c0_i32_7, %c0_i32_8] : memref<1000x32xf32, #tpu.memory_space<any>> -> memref<1x32xf32, #tpu.memory_space<any>>
    %c0_i32_9 = arith.constant 0 : i32
    %c0_i32_10 = arith.constant 0 : i32
    %11 = tpu.memref_slice %arg4[%c0_i32_9, %c0_i32_10] : memref<2x32xf32, #tpu.memory_space<vmem>> -> memref<1x32xf32, #tpu.memory_space<vmem>>
    %12 = tpu.memref_slice %arg5[%c0_i32_6] : memref<2x!tpu.dma_semaphore, #tpu.memory_space<semaphore_mem>> -> memref<1x!tpu.dma_semaphore, #tpu.memory_space<semaphore_mem>>
    %13 = tpu.memref_squeeze %12 : memref<1x!tpu.dma_semaphore, #tpu.memory_space<semaphore_mem>> -> memref<!tpu.dma_semaphore, #tpu.memory_space<semaphore_mem>>
    tpu.wait_dma2 semaphore(%13 : memref<!tpu.dma_semaphore, #tpu.memory_space<semaphore_mem>>) src(%10 : memref<1x32xf32, #tpu.memory_space<any>>) dst(%11 : memref<1x32xf32, #tpu.memory_space<vmem>>)
    %c1_i32_11 = arith.constant 1 : i32
    %c0_i32_12 = arith.constant 0 : i32
    %c0_i32_13 = arith.constant 0 : i32
    %14 = tpu.memref_slice %arg2[%c0_i32_12, %c0_i32_13] : memref<1000x32xf32, #tpu.memory_space<any>> -> memref<1x32xf32, #tpu.memory_space<any>>
    %c1_i32_14 = arith.constant 1 : i32
    %c0_i32_15 = arith.constant 0 : i32
    %15 = tpu.memref_slice %arg4[%c1_i32_14, %c0_i32_15] : memref<2x32xf32, #tpu.memory_space<vmem>> -> memref<1x32xf32, #tpu.memory_space<vmem>>
    %16 = tpu.memref_slice %arg5[%c1_i32_11] : memref<2x!tpu.dma_semaphore, #tpu.memory_space<semaphore_mem>> -> memref<1x!tpu.dma_semaphore, #tpu.memory_space<semaphore_mem>>
    %17 = tpu.memref_squeeze %16 : memref<1x!tpu.dma_semaphore, #tpu.memory_space<semaphore_mem>> -> memref<!tpu.dma_semaphore, #tpu.memory_space<semaphore_mem>>
    tpu.wait_dma2 semaphore(%17 : memref<!tpu.dma_semaphore, #tpu.memory_space<semaphore_mem>>) src(%14 : memref<1x32xf32, #tpu.memory_space<any>>) dst(%15 : memref<1x32xf32, #tpu.memory_space<vmem>>)
    %c0_16 = arith.constant 0 : index
    %c0_17 = arith.constant 0 : index
    %18 = vector.load %arg4[%c0_16, %c0_17] : memref<2x32xf32, #tpu.memory_space<vmem>>, vector<2x32xf32>
    %c0_18 = arith.constant 0 : index
    %c0_19 = arith.constant 0 : index
    %19 = vector.load %arg3[%c0_18, %c0_19] : memref<2x32xf32, #tpu.memory_space<vmem>>, vector<2x32xf32>
    tpu.vector_store %arg3[%c0_18, %c0_19], %18 {strides = array<i32>} : memref<2x32xf32, #tpu.memory_space<vmem>>, vector<2x32xf32>,
    return
  }
  func.func @transform_1(%arg0: i32, %arg1: memref<2xi32, #tpu.memory_space<smem>>) -> (i32, i32) {
    %c0_i32 = arith.constant 0 : i32
    %c0_i32_0 = arith.constant 0 : i32
    %c0_i32_1 = arith.constant 0 : i32
    return %c0_i32, %c0_i32_0 : i32, i32
  }
}

</mosaic_0001>

<llo_original>
// kernel: tpu_custom_call.1
$region0: #{tpu_custom_call.1}
  #allocation0 [shape = 'u32[]', space=smem, size = 0x4, offset = 0x4, fixed_abs, tag = 'smem constant byte address 0x4 - core index']
  #allocation1 [shape = 'u32[72,128]{1,0:T(1,128)}', space=vmem, size = 0x9000, scoped, tag = 'internal scratch']
  #allocation2 [shape = 'f32[2,32]{1,0:T(2,128)}', space=vmem, size = 0x400, scoped, tag = 'scratch operand']
  #allocation3 [shape = 's32[2]{0}', space=sflag, size = 0x8, scoped, tag = 'scratch operand']
  #allocation4 [shape = 's32[1]{0}', space=sflag, size = 0x4, scoped, tag = 'scoped memory for tpu_custom_call.1']
  #allocation5 [shape = 'u8[512]{0}', space=smem, size = 0x200, scoped, tag = 'prefetched SMEM operand 0']
  #allocation8 [shape = 's32[]', space=sflag, size = 0x4, offset = 0, fixed_abs, tag = 'sflag constant byte address 0x0 - dummy sync flag']
  #allocation9 [shape = 's32[]', space=sflag, size = 0x4, offset = 0, fixed_abs, tag = 'sflag constant byte address 0x0 - dummy sync flag']
  %s0 = inlined_call_operand.vmem [shape: s32[2], index: 0, kind: input, shape index: {}]
  %s1 = inlined_call_operand.vmem [shape: f32[1000,32], index: 1, kind: input, shape index: {}]
  %s2 = inlined_call_operand.hbm [shape: f32[2,32], index: 2, kind: output, shape index: {}]
  %s3 = sld [smem:[#allocation0]]
  $region70: #{tpu_custom_call.1} parent=0
    _
  %s5 = ssub.s32 1, %s3
  %s6 = scalar_select 0, %s5, %s3
  %s8 = sshll.u32 %s0, 4
  %s9 = int_to_ptr.vmem [resolvable:$true] %s8
  %11 = dma.vmem_to_smem %s9, 16, [#allocation5], [#allocation4]
  %13 = dma.done [#allocation4], 16
  %14 = sfence
  $region1: #{tpu_custom_call.1} parent=0
    #allocation6 [shape = 'u8[1024]{0}', space=vmem, size = 0x400, scoped, tag = 'output window, operand 0, single buffered']
    #allocation7 [shape = 's32[1]{0}', space=sflag, size = 0x4, scoped, tag = 'scoped memory for tpu_custom_call.1']
    %15 = vsyncpa [#allocation7], 0
    %s16 = sld [smem:[#allocation5]]
    %s17 = scalar_lea.vmem %s1, %s16
    // Predicated region
    $region2: #{tpu_custom_call.1} parent=1 // pred_check
      _
    $region3: #{tpu_custom_call.1} parent=1 // pred_check_branch
      %19 = sbr.rel target = $region5
    $region4: #{tpu_custom_call.1} parent=1 // pred_region
      // Predicated region
      $region17: #{tpu_custom_call.1} parent=4 // pred_check
        _
      $region18: #{tpu_custom_call.1} parent=4 // pred_check_branch
        %35 = sbr.rel (0) target = $region20
      $region19: #{tpu_custom_call.1} parent=4 // pred_region
        %s37 = ssub.s32 2, 1
        loop: start=0, step=1, limit=1
        $region21: #{tpu_custom_call.1} parent=19 // loop_pre_header
          _
        $region22: #{tpu_custom_call.1} parent=19 // loop_header
          %s39 = sphi 0, %s43
          %p40 = scmp.ge.s32.totalorder %s39, 1
          %s44 = sphi %s17, %s17
          %s45 = sphi [#allocation2], [#allocation2]
        $region23: #{tpu_custom_call.1} parent=19 // loop_header_branch
          %42 = sbr.rel (%p40) target = $region27
        $region24: #{tpu_custom_call.1} parent=19 // loop_body
          %v46 = vld [vmem:[%s44] sm:%s37]
          %47 = vst [vmem:[%s45] sm:%s37] %v46
        $region25: #{tpu_custom_call.1} parent=19 // loop_footer
          %s43 = sadd.s32 1, %s39
        $region26: #{tpu_custom_call.1} parent=19 // loop_footer_branch
          %38 = sbr.rel target = $region22
        $region27: #{tpu_custom_call.1} parent=19 // loop_exit
          _
      $region20: #{tpu_custom_call.1} parent=4 // pred_fallthru
        _
    $region5: #{tpu_custom_call.1} parent=1 // pred_fallthru
      _
    // Predicated region
    $region6: #{tpu_custom_call.1} parent=1 // pred_check
      _
    $region7: #{tpu_custom_call.1} parent=1 // pred_check_branch
      %21 = sbr.rel (0) target = $region9
    $region8: #{tpu_custom_call.1} parent=1 // pred_region
      %s23 = ssub.s32 2, 1
      loop: start=0, step=1, limit=1
      $region10: #{tpu_custom_call.1} parent=8 // loop_pre_header
        _
      $region11: #{tpu_custom_call.1} parent=8 // loop_header
        %s25 = sphi 0, %s29
        %p26 = scmp.ge.s32.totalorder %s25, 1
        %s30 = sphi %s17, %s17
        %s31 = sphi [#allocation2], [#allocation2]
      $region12: #{tpu_custom_call.1} parent=8 // loop_header_branch
        %28 = sbr.rel (%p26) target = $region16
      $region13: #{tpu_custom_call.1} parent=8 // loop_body
        %v32 = vld [vmem:[%s30] sm:%s23]
        %33 = vst [vmem:[%s31] sm:%s23] %v32
      $region14: #{tpu_custom_call.1} parent=8 // loop_footer
        %s29 = sadd.s32 1, %s25
      $region15: #{tpu_custom_call.1} parent=8 // loop_footer_branch
        %24 = sbr.rel target = $region11
      $region16: #{tpu_custom_call.1} parent=8 // loop_exit
        _
    $region9: #{tpu_custom_call.1} parent=1 // pred_fallthru
      _
    // Predicated region
    $region28: #{tpu_custom_call.1} parent=1 // pred_check
      _
    $region29: #{tpu_custom_call.1} parent=1 // pred_check_branch
      %50 = sbr.rel (0) target = $region31
    $region30: #{tpu_custom_call.1} parent=1 // pred_region
      %51 = vsyncadd [#allocation3], 16
    $region31: #{tpu_custom_call.1} parent=1 // pred_fallthru
      _
    %s52 = sld [smem:[#allocation5 + $0x1]]
    %s53 = scalar_lea.vmem %s1, %s52
    %s54 = scalar_lea.vmem [#allocation2], 1
    %s55 = scalar_lea.sflag [#allocation3], 1
    // Predicated region
    $region32: #{tpu_custom_call.1} parent=1 // pred_check
      _
    $region33: #{tpu_custom_call.1} parent=1 // pred_check_branch
      %57 = sbr.rel target = $region35
    $region34: #{tpu_custom_call.1} parent=1 // pred_region
      // Predicated region
      $region47: #{tpu_custom_call.1} parent=34 // pred_check
        _
      $region48: #{tpu_custom_call.1} parent=34 // pred_check_branch
        %73 = sbr.rel (0) target = $region50
      $region49: #{tpu_custom_call.1} parent=34 // pred_region
        %s75 = ssub.s32 2, 1
        loop: start=0, step=1, limit=1
        $region51: #{tpu_custom_call.1} parent=49 // loop_pre_header
          _
        $region52: #{tpu_custom_call.1} parent=49 // loop_header
          %s77 = sphi 0, %s81
          %p78 = scmp.ge.s32.totalorder %s77, 1
          %s82 = sphi %s53, %s53
          %s83 = sphi %s54, %s54
        $region53: #{tpu_custom_call.1} parent=49 // loop_header_branch
          %80 = sbr.rel (%p78) target = $region57
        $region54: #{tpu_custom_call.1} parent=49 // loop_body
          %v84 = vld [vmem:[%s82] sm:%s75]
          %85 = vst [vmem:[%s83] sm:%s75] %v84
        $region55: #{tpu_custom_call.1} parent=49 // loop_footer
          %s81 = sadd.s32 1, %s77
        $region56: #{tpu_custom_call.1} parent=49 // loop_footer_branch
          %76 = sbr.rel target = $region52
        $region57: #{tpu_custom_call.1} parent=49 // loop_exit
          _
      $region50: #{tpu_custom_call.1} parent=34 // pred_fallthru
        _
    $region35: #{tpu_custom_call.1} parent=1 // pred_fallthru
      _
    // Predicated region
    $region36: #{tpu_custom_call.1} parent=1 // pred_check
      _
    $region37: #{tpu_custom_call.1} parent=1 // pred_check_branch
      %59 = sbr.rel (0) target = $region39
    $region38: #{tpu_custom_call.1} parent=1 // pred_region
      %s61 = ssub.s32 2, 1
      loop: start=0, step=1, limit=1
      $region40: #{tpu_custom_call.1} parent=38 // loop_pre_header
        _
      $region41: #{tpu_custom_call.1} parent=38 // loop_header
        %s63 = sphi 0, %s67
        %p64 = scmp.ge.s32.totalorder %s63, 1
        %s68 = sphi %s53, %s53
        %s69 = sphi %s54, %s54
      $region42: #{tpu_custom_call.1} parent=38 // loop_header_branch
        %66 = sbr.rel (%p64) target = $region46
      $region43: #{tpu_custom_call.1} parent=38 // loop_body
        %v70 = vld [vmem:[%s68] sm:%s61]
        %71 = vst [vmem:[%s69] sm:%s61] %v70
      $region44: #{tpu_custom_call.1} parent=38 // loop_footer
        %s67 = sadd.s32 1, %s63
      $region45: #{tpu_custom_call.1} parent=38 // loop_footer_branch
        %62 = sbr.rel target = $region41
      $region46: #{tpu_custom_call.1} parent=38 // loop_exit
        _
    $region39: #{tpu_custom_call.1} parent=1 // pred_fallthru
      _
    // Predicated region
    $region58: #{tpu_custom_call.1} parent=1 // pred_check
      _
    $region59: #{tpu_custom_call.1} parent=1 // pred_check_branch
      %88 = sbr.rel (0) target = $region61
    $region60: #{tpu_custom_call.1} parent=1 // pred_region
      %89 = vsyncadd %s55, 16
    $region61: #{tpu_custom_call.1} parent=1 // pred_fallthru
      _
    %s90 = smul.u32 1, 1
    %s91 = sshll.u32 %s90, 4
    %92 = dma.done [#allocation3], %s91
    %s93 = sshll.u32 %s90, 4
    %94 = dma.done %s55, %s93
    %v95 = vld [vmem:[#allocation2] sm:$0x3]
    %vm96 = vcmask 254976
    %97 = vst.msk [vmem:[#allocation6] sm:$0x3] %vm96, %v95
    // Predicated region
    $region62: #{tpu_custom_call.1} parent=1 // pred_check
      _
    $region63: #{tpu_custom_call.1} parent=1 // pred_check_branch
      %99 = sbr.rel (0) target = $region65
    $region64: #{tpu_custom_call.1} parent=1 // pred_region
      %101 = vsyncadd [#allocation7], 0
      %s103 = sshll.u32 [#allocation6], 4
      %s104 = int_to_ptr.vmem [resolvable:$true] %s103
      %s105 = sshll.u32 %s2, 4
      %s106 = int_to_ptr.hbm [resolvable:$true] %s105
      %108 = dma.vmem_to_hbm [thread:$0]  %s104, 32, %s106, [#allocation7]
    $region65: #{tpu_custom_call.1} parent=1 // pred_fallthru
      _
    // Predicated region
    $region66: #{tpu_custom_call.1} parent=1 // pred_check
      _
    $region67: #{tpu_custom_call.1} parent=1 // pred_check_branch
      %110 = sbr.rel (0) target = $region69
    $region68: #{tpu_custom_call.1} parent=1 // pred_region
      %112 = dma.done [#allocation7], 32
    $region69: #{tpu_custom_call.1} parent=1 // pred_fallthru
      _
    %113 = vsyncpa [#allocation7], 1
  %114 = vsyncmov [#allocation3]
  %s115 = vpop.sfrf %114
  %p116 = scmp.eq.s32.totalorder %s115, 0
  %p117 = pneg %p116
  %119 = shalt.err (%p117)
  %s120 = scalar_lea.sflag [#allocation3], 1
  %121 = vsyncmov %s120
  %s122 = vpop.sfrf %121
  %p123 = scmp.eq.s32.totalorder %s122, 0
  %p124 = pneg %p123
  %126 = shalt.err (%p124)

</llo_original>
